<compile_context>
chip_gen: v6e
topology: v6e:2x2x1
jax: 0.10.0
libtpu: 0.0.40
codegen_flags: <defaults>
</compile_context>

<pallas_src>
import numpy as np
import jax
import jax.numpy as jnp
from jax.experimental import pallas as pl
from jax.experimental.pallas import tpu as pltpu


WINDOW_SIZE = (8, 4)                          # (Wh, Ww), PyTorch default
N_TOKENS = WINDOW_SIZE[0] * WINDOW_SIZE[1]    # 32

_TARGET_BLOCK_BYTES = 8 << 20    # ~8 MiB per buffer per grid step
_VMEM_LIMIT_BYTES = 48 << 20     # 4 double-buffered tiles @ 8 MiB + headroom
_PALLAS_MIN_BYTES = 1 << 20      # below this, plain-JAX add (let XLA fuse it)


def _build_relative_indices(window_size):
    """Static (N, N, 2) relative index table, identical to the PyTorch __init__."""
    wh, ww = window_size
    idx = np.array([[x, y] for x in range(wh) for y in range(ww)], dtype=np.int32)
    rel = idx[None, :, :] - idx[:, None, :]          # (N, N, 2)
    rel[:, :, 0] += wh - 1
    rel[:, :, 1] += ww - 1
    return rel


def _add_rel_pos_kernel(x_ref, bias_ref, o_ref):
    # x_ref:    (rows, N*N) lane-dense tile of attention scores
    # bias_ref: (1,    N*N) flattened bias, VMEM-resident across all grid steps
    o_ref[...] = x_ref[...] + bias_ref[...]          # sublane-broadcast over rows


def _choose_block_rows(bh, nn, dtype):
    """Dtype-aware row-block size (multiple of the sublane packing factor)."""
    itemsize = jnp.dtype(dtype).itemsize
    sub = max(8, 32 // itemsize)                     # 8 (f32), 16 (bf16), 32 (8-bit)
    target = max(sub, (_TARGET_BLOCK_BYTES // (nn * itemsize)) // sub * sub)
    if bh > target:
        return target
    # Whole tensor fits in one block: still split into >=2 parallel blocks when a
    # sublane-aligned split exists, so v7x's two TensorCores both get work.
    if bh >= 2 * sub:
        half = -(-bh // 2)
        return -(-half // sub) * sub
    return bh                                        # full-dim block (small BH)


def relative_position_embed(x, rel_pos_embedding, *, force_pallas=False,
                            donate_x=False):
    """x: (B, H, N, N); rel_pos_embedding: (N, N). Returns x + bias (broadcast)."""
    B, H, N, N2 = x.shape
    assert N == N2 == rel_pos_embedding.shape[0] == rel_pos_embedding.shape[1]

    BH = B * H
    NN = N * N
    itemsize = jnp.dtype(x.dtype).itemsize
    bias = rel_pos_embedding.astype(x.dtype)

    # Small tensors: a standalone custom call only adds dispatch overhead and
    # blocks XLA fusion -- plain JAX is strictly faster there.
    if not force_pallas and BH * NN * itemsize < _PALLAS_MIN_BYTES:
        return x + bias[None, None, :, :]

    # Lane-dense reshape; bias pre-cast so the in-kernel add is same-dtype.
    x_flat = x.reshape(BH, NN)
    bias_flat = bias.reshape(1, NN)

    block_rows = _choose_block_rows(BH, NN, x.dtype)
    grid = (pl.cdiv(BH, block_rows),)

    kwargs = {}
    if donate_x:
        # Only enable when the caller actually donates x (training path);
        # avoids surprising the eager/demo path that still reads x afterwards.
        kwargs["input_output_aliases"] = {0: 0}

    out_flat = pl.pallas_call(
        _add_rel_pos_kernel,
        out_shape=jax.ShapeDtypeStruct((BH, NN), x.dtype),
        grid=grid,
        in_specs=[
            pl.BlockSpec((block_rows, NN), lambda i: (i, 0)),
            pl.BlockSpec((1, NN), lambda i: (0, 0)),   # constant -> stays resident
        ],
        out_specs=pl.BlockSpec((block_rows, NN), lambda i: (i, 0)),
        compiler_params=pltpu.CompilerParams(
            dimension_semantics=("parallel",),
            vmem_limit_bytes=_VMEM_LIMIT_BYTES,
        ),
        cost_estimate=pl.CostEstimate(
            flops=BH * NN,
            transcendentals=0,
            bytes_accessed=2 * BH * NN * itemsize + NN * itemsize,
        ),
        **kwargs,
    )(x_flat, bias_flat)

    return out_flat.reshape(B, H, N, N)


if __name__ == "__main__":
    key = jax.random.PRNGKey(0)
    k_param, k_x = jax.random.split(key)

    # Deterministic parameter init (stands in for torch.randn in __init__).
    wh, ww = WINDOW_SIZE
    pos_embeddings = jax.random.normal(
        k_param, (2 * wh - 1, 2 * ww - 1), dtype=jnp.float32
    )

    # Static relative index table -> (N, N) bias via gather (glue, plain JAX).
    rel_idx = _build_relative_indices(WINDOW_SIZE)                          # (N, N, 2)
    rel_pos_embedding = pos_embeddings[rel_idx[:, :, 0], rel_idx[:, :, 1]]  # (N, N)

    # Example input: (batch=2, heads=4, N=32, N=32) attention scores.
    B, H = 2, 4
    x = jax.random.normal(k_x, (B, H, N_TOKENS, N_TOKENS), dtype=jnp.float32)

    # Reference computed up front (plain-JAX broadcast add).
    ref = x + rel_pos_embedding[None, None, :, :]

    # Exercise the Pallas kernel explicitly (demo shape is below the auto cutoff).
    out = relative_position_embed(x, rel_pos_embedding, force_pallas=True)
    out = jax.block_until_ready(out)
    assert out.shape == x.shape and out.dtype == x.dtype
    assert jnp.allclose(out, ref, atol=1e-6, rtol=1e-6)

    # Auto-dispatch path (small tensor -> plain-JAX fused add) must match too.
    out_auto = jax.block_until_ready(relative_position_embed(x, rel_pos_embedding))
    assert jnp.allclose(out_auto, ref, atol=1e-6, rtol=1e-6)

    print("KERNEL_OK")
</pallas_src>

<mosaic_0001>
module attributes {stable_mosaic.version = 11 : i64} {
  func.func @_add_rel_pos_kernel(%arg0: i32, %arg1: memref<8x1024xf32, #tpu.memory_space<vmem>>, %arg2: memref<1x1024xf32, #tpu.memory_space<vmem>>, %arg3: memref<8x1024xf32, #tpu.memory_space<vmem>>) attributes {dimension_semantics = [#tpu.dimension_semantics<parallel>], iteration_bounds = array<i64: 1>, scalar_prefetch = 0 : i64, scratch_operands = 0 : i64, tpu.core_type = #tpu.core_type<tc>, window_params = [{transform_indices = @transform_0, window_bounds = array<i64: 8, 1024>}, {pipeline_mode = #tpu.pipeline_mode<synchronous>, transform_indices = @transform_1, window_bounds = array<i64: 1, 1024>}, {transform_indices = @transform_2, window_bounds = array<i64: 8, 1024>}]} {
    %c0 = arith.constant 0 : index
    %c0_0 = arith.constant 0 : index
    %0 = vector.load %arg1[%c0, %c0_0] : memref<8x1024xf32, #tpu.memory_space<vmem>>, vector<8x1024xf32>
    %c0_1 = arith.constant 0 : index
    %c0_2 = arith.constant 0 : index
    %1 = vector.load %arg2[%c0_1, %c0_2] : memref<1x1024xf32, #tpu.memory_space<vmem>>, vector<1x1024xf32>
    %2 = vector.broadcast %1 : vector<1x1024xf32> to vector<8x1024xf32>
    %3 = arith.addf %0, %2 : vector<8x1024xf32>
    %c0_3 = arith.constant 0 : index
    %c0_4 = arith.constant 0 : index
    %4 = vector.load %arg3[%c0_3, %c0_4] : memref<8x1024xf32, #tpu.memory_space<vmem>>, vector<8x1024xf32>
    tpu.vector_store %arg3[%c0_3, %c0_4], %3 {strides = array<i32>} : memref<8x1024xf32, #tpu.memory_space<vmem>>, vector<8x1024xf32>,
    return
  }
  func.func @transform_0(%arg0: i32) -> (i32, i32) {
    %c0_i32 = arith.constant 0 : i32
    %c0_i32_0 = arith.constant 0 : i32
    return %arg0, %c0_i32 : i32, i32
  }
  func.func @transform_1(%arg0: i32) -> (i32, i32) {
    %c0_i32 = arith.constant 0 : i32
    %c0_i32_0 = arith.constant 0 : i32
    %c0_i32_1 = arith.constant 0 : i32
    return %c0_i32, %c0_i32_0 : i32, i32
  }
  func.func @transform_2(%arg0: i32) -> (i32, i32) {
    %c0_i32 = arith.constant 0 : i32
    %c0_i32_0 = arith.constant 0 : i32
    return %arg0, %c0_i32 : i32, i32
  }
}

</mosaic_0001>

<llo_original>
// kernel: tpu_custom_call.1
$region0: #{tpu_custom_call.1}
  #allocation0 [shape = 'u32[]', space=smem, size = 0x4, offset = 0x4, fixed_abs, tag = 'smem constant byte address 0x4 - core index']
  #allocation1 [shape = 'u32[144,128]{1,0:T(1,128)}', space=vmem, size = 0x12000, scoped, tag = 'internal scratch']
  %s0 = inlined_call_operand.hbm [shape: f32[8,1024], index: 0, kind: input, shape index: {}]
  %s1 = inlined_call_operand.hbm [shape: f32[1,1024], index: 1, kind: input, shape index: {}]
  %s2 = inlined_call_operand.hbm [shape: f32[8,1024], index: 2, kind: output, shape index: {}]
  %s3 = sld [smem:[#allocation0]]
  $region26: #{tpu_custom_call.1} parent=0
    _
  %s5 = ssub.s32 1, %s3
  %s6 = scalar_select 0, %s5, %s3
  $region1: #{tpu_custom_call.1} parent=0
    #allocation2 [shape = 'u8[32768]{0}', space=vmem, size = 0x8000, scoped, tag = 'input window, operand 0, single buffered']
    #allocation3 [shape = 's32[1]{0}', space=sflag, size = 0x4, scoped, tag = 'scoped memory for tpu_custom_call.1']
    #allocation4 [shape = 's32[1]{0}', space=sflag, size = 0x4, scoped, tag = 'scoped memory for tpu_custom_call.1']
    #allocation5 [shape = 'u8[4096]{0}', space=vmem, size = 0x1000, scoped, tag = 'input window, operand 1, single buffered']
    #allocation6 [shape = 's32[1]{0}', space=sflag, size = 0x4, scoped, tag = 'scoped memory for tpu_custom_call.1']
    #allocation7 [shape = 'u8[32768]{0}', space=vmem, size = 0x8000, scoped, tag = 'output window, operand 0, single buffered']
    %7 = vsyncpa [#allocation3], 0
    %8 = vsyncpa [#allocation6], 0
    %9 = vsyncpa [#allocation4], 0
    // Predicated region
    $region2: #{tpu_custom_call.1} parent=1 // pred_check
      _
    $region3: #{tpu_custom_call.1} parent=1 // pred_check_branch
      %11 = sbr.rel (0) target = $region5
    $region4: #{tpu_custom_call.1} parent=1 // pred_region
      %s13 = ssub.s32 1024, 1024
      %14 = vsyncadd [#allocation3], %s13
      %s16 = sshll.u32 [#allocation2], 4
      %s17 = int_to_ptr.vmem [resolvable:$true] %s16
      %19 = dma.hbm_to_vmem [thread:$0]  %s0, 1024, %s17, [#allocation3]
    $region5: #{tpu_custom_call.1} parent=1 // pred_fallthru
      _
    // Predicated region
    $region6: #{tpu_custom_call.1} parent=1 // pred_check
      _
    $region7: #{tpu_custom_call.1} parent=1 // pred_check_branch
      %21 = sbr.rel (0) target = $region9
    $region8: #{tpu_custom_call.1} parent=1 // pred_region
      %s23 = ssub.s32 128, 128
      %24 = vsyncadd [#allocation6], %s23
      %s26 = sshll.u32 [#allocation5], 4
      %s27 = int_to_ptr.vmem [resolvable:$true] %s26
      %29 = dma.hbm_to_vmem [thread:$0]  %s1, 128, %s27, [#allocation6]
    $region9: #{tpu_custom_call.1} parent=1 // pred_fallthru
      _
    // Predicated region
    $region10: #{tpu_custom_call.1} parent=1 // pred_check
      _
    $region11: #{tpu_custom_call.1} parent=1 // pred_check_branch
      %31 = sbr.rel (0) target = $region13
    $region12: #{tpu_custom_call.1} parent=1 // pred_region
      %32 = dma.done [#allocation3], 1024
    $region13: #{tpu_custom_call.1} parent=1 // pred_fallthru
      _
    // Predicated region
    $region14: #{tpu_custom_call.1} parent=1 // pred_check
      _
    $region15: #{tpu_custom_call.1} parent=1 // pred_check_branch
      %34 = sbr.rel (0) target = $region17
    $region16: #{tpu_custom_call.1} parent=1 // pred_region
      %35 = dma.done [#allocation6], 128
    $region17: #{tpu_custom_call.1} parent=1 // pred_fallthru
      _
    %v36 = vld [vmem:[#allocation2] sm:$0xff]
    %v37 = vld [vmem:[#allocation2 + $0x8] sm:$0xff]
    %v38 = vld [vmem:[#allocation2 + $0x10] sm:$0xff]
    %v39 = vld [vmem:[#allocation2 + $0x18] sm:$0xff]
    %v40 = vld [vmem:[#allocation2 + $0x20] sm:$0xff]
    %v41 = vld [vmem:[#allocation2 + $0x28] sm:$0xff]
    %v42 = vld [vmem:[#allocation2 + $0x30] sm:$0xff]
    %v43 = vld [vmem:[#allocation2 + $0x38] sm:$0xff]
    %v44 = vld [vmem:[#allocation5] sm:$0xff]
    %v46 = vlaneseq
    %v47 = vshrl.u32 %v46, 7
    %v48 = vsub.s32 0, %v47
    %v49 = vrot.slane %v44, %v48
    %v50 = vlaneseq
    %v51 = vshrl.u32 %v50, 7
    %v52 = vsub.s32 1, %v51
    %v53 = vrot.slane %v44, %v52
    %v54 = vlaneseq
    %v55 = vshrl.u32 %v54, 7
    %v56 = vsub.s32 2, %v55
    %v57 = vrot.slane %v44, %v56
    %v58 = vlaneseq
    %v59 = vshrl.u32 %v58, 7
    %v60 = vsub.s32 3, %v59
    %v61 = vrot.slane %v44, %v60
    %v62 = vlaneseq
    %v63 = vshrl.u32 %v62, 7
    %v64 = vsub.s32 4, %v63
    %v65 = vrot.slane %v44, %v64
    %v66 = vlaneseq
    %v67 = vshrl.u32 %v66, 7
    %v68 = vsub.s32 5, %v67
    %v69 = vrot.slane %v44, %v68
    %v70 = vlaneseq
    %v71 = vshrl.u32 %v70, 7
    %v72 = vsub.s32 6, %v71
    %v73 = vrot.slane %v44, %v72
    %v74 = vlaneseq
    %v75 = vshrl.u32 %v74, 7
    %v76 = vsub.s32 7, %v75
    %v77 = vrot.slane %v44, %v76
    %v86 = vadd.f32 %v36, %v49
    %v87 = vadd.f32 %v37, %v53
    %v88 = vadd.f32 %v38, %v57
    %v89 = vadd.f32 %v39, %v61
    %v90 = vadd.f32 %v40, %v65
    %v91 = vadd.f32 %v41, %v69
    %v92 = vadd.f32 %v42, %v73
    %v93 = vadd.f32 %v43, %v77
    %94 = vst [vmem:[#allocation7] sm:$0xff] %v86
    %95 = vst [vmem:[#allocation7 + $0x8] sm:$0xff] %v87
    %96 = vst [vmem:[#allocation7 + $0x10] sm:$0xff] %v88
    %97 = vst [vmem:[#allocation7 + $0x18] sm:$0xff] %v89
    %98 = vst [vmem:[#allocation7 + $0x20] sm:$0xff] %v90
    %99 = vst [vmem:[#allocation7 + $0x28] sm:$0xff] %v91
    %100 = vst [vmem:[#allocation7 + $0x30] sm:$0xff] %v92
    %101 = vst [vmem:[#allocation7 + $0x38] sm:$0xff] %v93
    // Predicated region
    $region18: #{tpu_custom_call.1} parent=1 // pred_check
      _
    $region19: #{tpu_custom_call.1} parent=1 // pred_check_branch
      %103 = sbr.rel (0) target = $region21
    $region20: #{tpu_custom_call.1} parent=1 // pred_region
      %s105 = ssub.s32 1024, 1024
      %106 = vsyncadd [#allocation4], %s105
      %s108 = sshll.u32 [#allocation7], 4
      %s109 = int_to_ptr.vmem [resolvable:$true] %s108
      %111 = dma.vmem_to_hbm [thread:$0]  %s109, 1024, %s2, [#allocation4]
    $region21: #{tpu_custom_call.1} parent=1 // pred_fallthru
      _
    // Predicated region
    $region22: #{tpu_custom_call.1} parent=1 // pred_check
      _
    $region23: #{tpu_custom_call.1} parent=1 // pred_check_branch
      %113 = sbr.rel (0) target = $region25
    $region24: #{tpu_custom_call.1} parent=1 // pred_region
      %114 = dma.done [#allocation4], 1024
    $region25: #{tpu_custom_call.1} parent=1 // pred_fallthru
      _
    %115 = vsyncpa [#allocation3], 1
    %116 = vsyncpa [#allocation6], 1
    %117 = vsyncpa [#allocation4], 1

</llo_original>
